<compile_context>
chip_gen: v7x
topology: tpu7x:2x2x1
jax: 0.10.0
libtpu: 0.0.40
codegen_flags: <defaults>
</compile_context>

<pallas_src>
import functools

import jax
import jax.numpy as jnp
import numpy as np
from jax.experimental import pallas as pl
from jax.experimental.pallas import tpu as pltpu

_LANE = 128


def _dice_ce_kernel(x_ref, t_ref, out_ref, acc_inter, acc_ce, *,
                    n_pixels, tls, group, has_tail):
    """Accumulates sum(p[target]) and sum(-log p[target]) over pixel tiles."""
    l = pl.program_id(1)
    nl = pl.num_programs(1)

    @pl.when(l == 0)
    def _():
        acc_inter[...] = jnp.zeros_like(acc_inter)
        acc_ce[...] = jnp.zeros_like(acc_ce)

    x = x_ref[0].astype(jnp.float32)          # (C, TLS, 128)
    t = t_ref[0].astype(jnp.int32)            # (TLS, 128)

    # log-sum-exp over the leading channel axis: pure VALU/EUP, no XLU.
    m = jnp.max(x, axis=0)                    # (TLS, 128)
    e = jnp.exp(x - m[None])                  # (C, TLS, 128), always <= 1
    s = jnp.sum(e, axis=0)                    # (TLS, 128)
    logz = m + jnp.log(s)                     # (TLS, 128)

    # Target-channel selection via iota compare (no gather, no full softmax).
    cio = jax.lax.broadcasted_iota(jnp.int32, x.shape, 0)
    oh = cio == t[None]                       # (C, TLS, 128) bool
    xt = jnp.sum(jnp.where(oh, x, 0.0), axis=0)    # x[target]
    et = jnp.sum(jnp.where(oh, e, 0.0), axis=0)    # exp(x[target] - m)

    inter_pix = et / s                        # softmax prob of target class
    ce_pix = logz - xt                        # -log softmax[target]

    def _accumulate(ipix, cpix):
        # Group-reduce to one vreg slab (pure vreg adds), single scratch RMW.
        acc_inter[...] += ipix.reshape(-1, group, _LANE).sum(axis=0)
        acc_ce[...] += cpix.reshape(-1, group, _LANE).sum(axis=0)

    if has_tail:
        @pl.when(l == nl - 1)
        def _():
            row = jax.lax.broadcasted_iota(jnp.int32, (tls, _LANE), 0)
            lane = jax.lax.broadcasted_iota(jnp.int32, (tls, _LANE), 1)
            pix = (l * tls + row) * _LANE + lane
            valid = pix < n_pixels
            _accumulate(jnp.where(valid, inter_pix, 0.0),
                        jnp.where(valid, ce_pix, 0.0))

        @pl.when(l != nl - 1)
        def _():
            _accumulate(inter_pix, ce_pix)
    else:
        _accumulate(inter_pix, ce_pix)

    # Epilogue: one cross-sublane reduce per batch element, lane-dense store.
    @pl.when(l == nl - 1)
    def _():
        out_ref[...] = jnp.concatenate(
            [jnp.sum(acc_inter[...], axis=0, keepdims=True),
             jnp.sum(acc_ce[...], axis=0, keepdims=True)],
            axis=0)[None]                      # (1, 2, 128)


def dice_ce_loss(inputs, targets, *, dice_weight=1.0, ce_weight=1.0,
                 eps=1e-5, tile_bytes=4 * 1024 * 1024):
    """inputs: (N, C, H, W) float logits; targets: (N, H, W) int labels."""
    N, C, H, W = inputs.shape
    L = H * W
    M = N * L

    x = inputs.reshape(N, C, L)               # NCHW consumed directly
    if (not jnp.issubdtype(targets.dtype, jnp.integer)
            or jnp.dtype(targets.dtype).itemsize > 4):
        targets = targets.astype(jnp.int32)
    t = targets.reshape(N, L)                  # keep native int dtype

    # Pixel axis padded to a multiple of 128 lanes, then viewed 2-D.
    ls = pl.cdiv(L, _LANE)
    l_pad = ls * _LANE
    if l_pad != L:
        # TODO(synk): pad is one extra HBM copy; typical H*W is 128-divisible.
        x = jnp.pad(x, ((0, 0), (0, 0), (0, l_pad - L)))
        t = jnp.pad(t, ((0, 0), (0, l_pad - L)))
    x = x.reshape(N, C, ls, _LANE)
    t = t.reshape(N, ls, _LANE)

    # Pixel tile: ~tile_bytes of logits per block, multiple of 32 sublane rows.
    itemsize = jnp.dtype(inputs.dtype).itemsize
    row_bytes = C * _LANE * itemsize
    tls = tile_bytes // max(row_bytes, 1)
    tls = max(32, min(8192, (tls // 32) * 32))
    if ls <= tls:
        tls = ls                               # full pixel axis: legal block
    grid_l = pl.cdiv(ls, tls)
    group = 8 if tls % 8 == 0 else tls
    has_tail = grid_l * tls * _LANE > L

    kernel = functools.partial(_dice_ce_kernel, n_pixels=L, tls=tls,
                               group=group, has_tail=has_tail)

    partials = pl.pallas_call(
        kernel,
        out_shape=jax.ShapeDtypeStruct((N, 2, _LANE), jnp.float32),
        grid_spec=pltpu.PrefetchScalarGridSpec(
            num_scalar_prefetch=0,
            grid=(N, grid_l),
            in_specs=[
                pl.BlockSpec((1, C, tls, _LANE), lambda n, l: (n, 0, l, 0)),
                pl.BlockSpec((1, tls, _LANE), lambda n, l: (n, l, 0)),
            ],
            out_specs=pl.BlockSpec((1, 2, _LANE), lambda n, l: (n, 0, 0)),
            scratch_shapes=[
                pltpu.VMEM((group, _LANE), jnp.float32),
                pltpu.VMEM((group, _LANE), jnp.float32),
            ],
        ),
        compiler_params=pltpu.CompilerParams(
            dimension_semantics=("parallel", "arbitrary"),
            vmem_limit_bytes=32 * 1024 * 1024,
        ),
    )(x, t)

    intersection = jnp.sum(partials[:, 0, :])
    ce_sum = jnp.sum(partials[:, 1, :])

    # Dice denominator is analytic: softmax and one-hot each sum to 1/pixel,
    # so sum(p) + sum(onehot) == 2*N*H*W for in-range labels.
    dice_score = (2.0 * intersection + eps) / (2.0 * M + eps)
    dice_loss_ = 1.0 - dice_score

    # F.cross_entropy(..., reduction='mean') over all N*H*W pixels.
    cross_entropy = ce_sum / M

    return dice_weight * dice_loss_ + ce_weight * cross_entropy


def _reference(inputs, targets, dice_weight=1.0, ce_weight=1.0, eps=1e-5):
    """Pure-JAX reference replicating the PyTorch semantics."""
    N, C, H, W = inputs.shape
    p = jax.nn.softmax(inputs.astype(jnp.float32), axis=1)          # (N,C,H,W)
    onehot = jax.nn.one_hot(targets, C, dtype=jnp.float32)          # (N,H,W,C)
    onehot = jnp.transpose(onehot, (0, 3, 1, 2))                    # (N,C,H,W)
    inter = jnp.sum(p * onehot)
    denom = jnp.sum(p) + jnp.sum(onehot)
    dice = 1.0 - (2.0 * inter + eps) / (denom + eps)
    logp = jax.nn.log_softmax(inputs.astype(jnp.float32), axis=1)
    ce = -jnp.mean(jnp.sum(logp * onehot, axis=1))
    return dice_weight * dice + ce_weight * ce


if __name__ == "__main__":
    key = jax.random.PRNGKey(0)
    k1, k2, k3, k4 = jax.random.split(key, 4)

    # Case 1: 128-divisible pixel count, int32 labels (fast unmasked path).
    N, C, H, W = 2, 4, 16, 16
    inputs = jax.random.normal(k1, (N, C, H, W), dtype=jnp.float32)
    targets = jax.random.randint(k2, (N, H, W), 0, C, dtype=jnp.int32)
    loss = jax.block_until_ready(dice_ce_loss(inputs, targets))
    ref = _reference(inputs, targets)
    np.testing.assert_allclose(np.asarray(loss), np.asarray(ref),
                               rtol=1e-4, atol=1e-5)

    # Case 2: non-128-divisible pixel count + int8 labels (pad / tail-mask /
    # narrow-dtype streaming path).
    N2, C2, H2, W2 = 2, 4, 5, 7
    inputs2 = jax.random.normal(k3, (N2, C2, H2, W2), dtype=jnp.float32)
    targets2 = jax.random.randint(k4, (N2, H2, W2), 0, C2,
                                  dtype=jnp.int32).astype(jnp.int8)
    loss2 = jax.block_until_ready(dice_ce_loss(inputs2, targets2))
    ref2 = _reference(inputs2, targets2.astype(jnp.int32))
    np.testing.assert_allclose(np.asarray(loss2), np.asarray(ref2),
                               rtol=1e-4, atol=1e-5)

    print("KERNEL_OK")
</pallas_src>

<mosaic_0001>
module attributes {stable_mosaic.version = 11 : i64} {
  func.func @_dice_ce_kernel(%arg0: i32, %arg1: i32, %arg2: memref<1x4x2x128xf32, #tpu.memory_space<vmem>>, %arg3: memref<1x2x128xi32, #tpu.memory_space<vmem>>, %arg4: memref<1x2x128xf32, #tpu.memory_space<vmem>>, %arg5: memref<2x128xf32, #tpu.memory_space<vmem>>, %arg6: memref<2x128xf32, #tpu.memory_space<vmem>>) attributes {dimension_semantics = [#tpu.dimension_semantics<parallel>, #tpu.dimension_semantics<arbitrary>], iteration_bounds = array<i64: 2, 1>, scalar_prefetch = 0 : i64, scratch_operands = 2 : i64, tpu.core_type = #tpu.core_type<tc>, window_params = [{transform_indices = @transform_0, window_bounds = array<i64: 1, 4, 2, 128>}, {transform_indices = @transform_1, window_bounds = array<i64: 1, 2, 128>}, {transform_indices = @transform_2, window_bounds = array<i64: 1, 2, 128>}]} {
    %c0_i32 = arith.constant 0 : i32
    %0 = arith.cmpi eq, %arg1, %c0_i32 : i32
    %1 = arith.extui %0 : i1 to i32
    %c0_i32_0 = arith.constant 0 : i32
    %2 = arith.cmpi ne, %1, %c0_i32_0 : i32
    scf.if %2 {
      %cst_24 = arith.constant 0.000000e+00 : f32
      %40 = vector.broadcast %cst_24 : f32 to vector<2x128xf32>
      %c0_25 = arith.constant 0 : index
      %c0_26 = arith.constant 0 : index
      %41 = vector.load %arg5[%c0_25, %c0_26] : memref<2x128xf32, #tpu.memory_space<vmem>>, vector<2x128xf32>
      tpu.vector_store %arg5[%c0_25, %c0_26], %40 {strides = array<i32>} : memref<2x128xf32, #tpu.memory_space<vmem>>, vector<2x128xf32>,
      %cst_27 = arith.constant 0.000000e+00 : f32
      %42 = vector.broadcast %cst_27 : f32 to vector<2x128xf32>
      %c0_28 = arith.constant 0 : index
      %c0_29 = arith.constant 0 : index
      %43 = vector.load %arg6[%c0_28, %c0_29] : memref<2x128xf32, #tpu.memory_space<vmem>>, vector<2x128xf32>
      tpu.vector_store %arg6[%c0_28, %c0_29], %42 {strides = array<i32>} : memref<2x128xf32, #tpu.memory_space<vmem>>, vector<2x128xf32>,
    } else {
    }
    %c0 = arith.constant 0 : index
    %c0_1 = arith.constant 0 : index
    %c0_2 = arith.constant 0 : index
    %c0_3 = arith.constant 0 : index
    %3 = vector.load %arg2[%c0, %c0_1, %c0_2, %c0_3] : memref<1x4x2x128xf32, #tpu.memory_space<vmem>>, vector<1x4x2x128xf32>
    %4 = vector.shape_cast %3 : vector<1x4x2x128xf32> to vector<4x2x128xf32>
    %c0_4 = arith.constant 0 : index
    %c0_5 = arith.constant 0 : index
    %c0_6 = arith.constant 0 : index
    %5 = vector.load %arg3[%c0_4, %c0_5, %c0_6] : memref<1x2x128xi32, #tpu.memory_space<vmem>>, vector<1x2x128xi32>
    %6 = vector.shape_cast %5 : vector<1x2x128xi32> to vector<2x128xi32>
    %cst = arith.constant dense<0xFF800000> : vector<2x128xf32>
    %7 = vector.multi_reduction <maximumf>, %4, %cst [0] : vector<4x2x128xf32> to vector<2x128xf32>
    %8 = vector.shape_cast %7 : vector<2x128xf32> to vector<1x2x128xf32>
    %9 = vector.broadcast %8 : vector<1x2x128xf32> to vector<4x2x128xf32>
    %10 = arith.subf %4, %9 : vector<4x2x128xf32>
    %11 = math.exp %10 : vector<4x2x128xf32>
    %cst_7 = arith.constant dense<0.000000e+00> : vector<2x128xf32>
    %12 = vector.multi_reduction <add>, %11, %cst_7 [0] : vector<4x2x128xf32> to vector<2x128xf32>
    %13 = math.log %12 : vector<2x128xf32>
    %14 = arith.addf %7, %13 : vector<2x128xf32>
    %15 = tpu.iota {dimensions = array<i32: 0>} : vector<4x2x128xi32>
    %16 = vector.shape_cast %6 : vector<2x128xi32> to vector<1x2x128xi32>
    %17 = vector.broadcast %16 : vector<1x2x128xi32> to vector<4x2x128xi32>
    %18 = arith.cmpi eq, %15, %17 : vector<4x2x128xi32>
    %cst_8 = arith.constant 0.000000e+00 : f32
    %19 = vector.broadcast %cst_8 : f32 to vector<4x2x128xf32>
    %20 = arith.select %18, %4, %19 : vector<4x2x128xi1>, vector<4x2x128xf32>
    %cst_9 = arith.constant dense<0.000000e+00> : vector<2x128xf32>
    %21 = vector.multi_reduction <add>, %20, %cst_9 [0] : vector<4x2x128xf32> to vector<2x128xf32>
    %cst_10 = arith.constant 0.000000e+00 : f32
    %22 = vector.broadcast %cst_10 : f32 to vector<4x2x128xf32>
    %23 = arith.select %18, %11, %22 : vector<4x2x128xi1>, vector<4x2x128xf32>
    %cst_11 = arith.constant dense<0.000000e+00> : vector<2x128xf32>
    %24 = vector.multi_reduction <add>, %23, %cst_11 [0] : vector<4x2x128xf32> to vector<2x128xf32>
    %25 = arith.divf %24, %12 : vector<2x128xf32>
    %26 = arith.subf %14, %21 : vector<2x128xf32>
    %c0_12 = arith.constant 0 : index
    %c0_13 = arith.constant 0 : index
    %27 = vector.load %arg5[%c0_12, %c0_13] : memref<2x128xf32, #tpu.memory_space<vmem>>, vector<2x128xf32>
    %28 = vector.shape_cast %25 : vector<2x128xf32> to vector<1x2x128xf32>
    %cst_14 = arith.constant dense<0.000000e+00> : vector<2x128xf32>
    %29 = vector.multi_reduction <add>, %28, %cst_14 [0] : vector<1x2x128xf32> to vector<2x128xf32>
    %30 = arith.addf %27, %29 : vector<2x128xf32>
    %c0_15 = arith.constant 0 : index
    %c0_16 = arith.constant 0 : index
    %31 = vector.load %arg5[%c0_15, %c0_16] : memref<2x128xf32, #tpu.memory_space<vmem>>, vector<2x128xf32>
    tpu.vector_store %arg5[%c0_15, %c0_16], %30 {strides = array<i32>} : memref<2x128xf32, #tpu.memory_space<vmem>>, vector<2x128xf32>,
    %c0_17 = arith.constant 0 : index
    %c0_18 = arith.constant 0 : index
    %32 = vector.load %arg6[%c0_17, %c0_18] : memref<2x128xf32, #tpu.memory_space<vmem>>, vector<2x128xf32>
    %33 = vector.shape_cast %26 : vector<2x128xf32> to vector<1x2x128xf32>
    %cst_19 = arith.constant dense<0.000000e+00> : vector<2x128xf32>
    %34 = vector.multi_reduction <add>, %33, %cst_19 [0] : vector<1x2x128xf32> to vector<2x128xf32>
    %35 = arith.addf %32, %34 : vector<2x128xf32>
    %c0_20 = arith.constant 0 : index
    %c0_21 = arith.constant 0 : index
    %36 = vector.load %arg6[%c0_20, %c0_21] : memref<2x128xf32, #tpu.memory_space<vmem>>, vector<2x128xf32>
    tpu.vector_store %arg6[%c0_20, %c0_21], %35 {strides = array<i32>} : memref<2x128xf32, #tpu.memory_space<vmem>>, vector<2x128xf32>,
    %c0_i32_22 = arith.constant 0 : i32
    %37 = arith.cmpi eq, %arg1, %c0_i32_22 : i32
    %38 = arith.extui %37 : i1 to i32
    %c0_i32_23 = arith.constant 0 : i32
    %39 = arith.cmpi ne, %38, %c0_i32_23 : i32
    scf.if %39 {
      %c0_24 = arith.constant 0 : index
      %c0_25 = arith.constant 0 : index
      %40 = vector.load %arg5[%c0_24, %c0_25] : memref<2x128xf32, #tpu.memory_space<vmem>>, vector<2x128xf32>
      %cst_26 = arith.constant dense<0.000000e+00> : vector<128xf32>
      %41 = vector.multi_reduction <add>, %40, %cst_26 [0] : vector<2x128xf32> to vector<128xf32>
      %42 = vector.shape_cast %41 : vector<128xf32> to vector<1x128xf32>
      %c0_27 = arith.constant 0 : index
      %c0_28 = arith.constant 0 : index
      %43 = vector.load %arg6[%c0_27, %c0_28] : memref<2x128xf32, #tpu.memory_space<vmem>>, vector<2x128xf32>
      %cst_29 = arith.constant dense<0.000000e+00> : vector<128xf32>
      %44 = vector.multi_reduction <add>, %43, %cst_29 [0] : vector<2x128xf32> to vector<128xf32>
      %45 = vector.shape_cast %44 : vector<128xf32> to vector<1x128xf32>
      %46 = tpu.concatenate %42, %45 in 0 : vector<1x128xf32>, vector<1x128xf32> -> vector<2x128xf32>
      %47 = vector.shape_cast %46 : vector<2x128xf32> to vector<1x2x128xf32>
      %c0_30 = arith.constant 0 : index
      %c0_31 = arith.constant 0 : index
      %c0_32 = arith.constant 0 : index
      %48 = vector.load %arg4[%c0_30, %c0_31, %c0_32] : memref<1x2x128xf32, #tpu.memory_space<vmem>>, vector<1x2x128xf32>
      tpu.vector_store %arg4[%c0_30, %c0_31, %c0_32], %47 {strides = array<i32>} : memref<1x2x128xf32, #tpu.memory_space<vmem>>, vector<1x2x128xf32>,
    } else {
    }
    return
  }
  func.func @transform_0(%arg0: i32, %arg1: i32) -> (i32, i32, i32, i32) {
    %c0_i32 = arith.constant 0 : i32
    %c0_i32_0 = arith.constant 0 : i32
    %c0_i32_1 = arith.constant 0 : i32
    return %arg0, %c0_i32, %arg1, %c0_i32_0 : i32, i32, i32, i32
  }
  func.func @transform_1(%arg0: i32, %arg1: i32) -> (i32, i32, i32) {
    %c0_i32 = arith.constant 0 : i32
    %c0_i32_0 = arith.constant 0 : i32
    return %arg0, %arg1, %c0_i32 : i32, i32, i32
  }
  func.func @transform_2(%arg0: i32, %arg1: i32) -> (i32, i32, i32) {
    %c0_i32 = arith.constant 0 : i32
    %c0_i32_0 = arith.constant 0 : i32
    %c0_i32_1 = arith.constant 0 : i32
    return %arg0, %c0_i32, %c0_i32_0 : i32, i32, i32
  }
}

</mosaic_0001>

<llo_original>
// kernel: tpu_custom_call.1
$region0: #{tpu_custom_call.1}
  #allocation0 [shape = 'u32[]', space=smem, size = 0x4, offset = 0x4, fixed_abs, tag = 'smem constant byte address 0x4 - core index']
  #allocation1 [shape = 'u32[144,128]{1,0:T(1,128)}', space=vmem, size = 0x12000, scoped, tag = 'internal scratch']
  #allocation2 [shape = 'f32[2,128]{1,0:T(2,128)}', space=vmem, size = 0x400, scoped, tag = 'scratch operand']
  #allocation3 [shape = 'f32[2,128]{1,0:T(2,128)}', space=vmem, size = 0x400, scoped, tag = 'scratch operand']
  %s0 = inlined_call_operand.hbm [shape: f32[2,4,2,128], index: 0, kind: input, shape index: {}]
  %s1 = inlined_call_operand.hbm [shape: s32[2,2,128], index: 1, kind: input, shape index: {}]
  %s2 = inlined_call_operand.hbm [shape: f32[2,2,128], index: 2, kind: output, shape index: {}]
  %s3 = sld [smem:[#allocation0]]
  $region57: #{tpu_custom_call.1} parent=0
    _
  %s5 = ssub.s32 1, %s3
  %s6 = scalar_select 0, %s5, %s3
  $region1: #{tpu_custom_call.1} parent=0
    #allocation4 [shape = 'u8[8192]{0}', space=vmem, size = 0x2000, scoped, tag = 'input window, operand 0']
    #allocation5 [shape = 's32[2]{0}', space=sflag, size = 0x8, scoped, tag = 'scoped memory for tpu_custom_call.1']
    #allocation6 [shape = 's32[2]{0}', space=sflag, size = 0x8, scoped, tag = 'scoped memory for tpu_custom_call.1']
    #allocation7 [shape = 'u8[2048]{0}', space=vmem, size = 0x800, scoped, tag = 'input window, operand 1']
    #allocation8 [shape = 's32[2]{0}', space=sflag, size = 0x8, scoped, tag = 'scoped memory for tpu_custom_call.1']
    #allocation9 [shape = 'u8[2048]{0}', space=vmem, size = 0x800, scoped, tag = 'output window, operand 0']
    %7 = vsyncpa [#allocation5], 0
    %s8 = scalar_lea.sflag [#allocation5], 1
    %9 = vsyncpa %s8, 0
    %10 = vsyncpa [#allocation8], 0
    %s11 = scalar_lea.sflag [#allocation8], 1
    %12 = vsyncpa %s11, 0
    %13 = vsyncpa [#allocation6], 0
    %s14 = scalar_lea.sflag [#allocation6], 1
    %15 = vsyncpa %s14, 0
    loop: start=0, step=1, limit=4
    $region2: #{tpu_custom_call.1} parent=1 // loop_pre_header
      _
    $region3: #{tpu_custom_call.1} parent=1 // loop_header
      %s17 = sphi 0, %s21
      %p18 = scmp.ge.s32.totalorder %s17, 4
      %s24 = sphi 0, %s36
      %s25 = sphi 0, %s32
      %s26 = sphi 0, %s24
      %s27 = sphi 0, %s25
      %s28 = sphi 0, %s26
      %s29 = sphi 0, %s27
      %s41 = sphi 0, %s43
      %s44 = sphi 0, %s41
      %s45 = sphi 0, %s44
      %s61 = sphi 0, %s45
      %s69 = sphi 0, %s71
      %s72 = sphi 0, %s69
      %s73 = sphi 0, %s72
      %s89 = sphi 0, %s73
      %s95 = sphi 0, %s97
      %s98 = sphi 0, %s95
      %s99 = sphi 0, %s98
      %s115 = sphi 0, %s99
    $region4: #{tpu_custom_call.1} parent=1 // loop_header_branch
      %20 = sbr.rel (%p18) target = $region8
    $region5: #{tpu_custom_call.1} parent=1 // loop_body
      %s22 = ssub.s32 %s17, 1
      %s23 = ssub.s32 %s17, 2
      %s30 = sadd.s32 1, %s25
      %p31 = scmp.ge.s32.totalorder %s30, 1
      %s32 = scalar_select %p31, 0, %s30
      %s33 = sadd.s32 1, %s24
      %s34 = scalar_select %p31, %s33, %s24
      %p35 = scmp.ge.s32.totalorder %s34, 2
      %s36 = scalar_select %p35, 0, %s34
      %s37 = ssub.s32 %s24, %s36
      %s38 = ssub.s32 %s25, %s32
      %s39 = sor.u32 %s37, %s38
      %p40 = scmp.eq.s32.totalorder %s39, 0
      %s42 = sadd.s32 %s41, 1
      %s43 = scalar_select %p40, %s41, %s42
      %p46 = pneg %p40
      %p47 = scmp.eq.s32.totalorder %s17, 1
      %p48 = por %p46, %p47
      %p49 = scmp.ne.s32.totalorder %s41, %s44
      %p50 = scmp.eq.s32.totalorder %s17, 0
      %p51 = por %p49, %p50
      %p52 = scmp.ne.s32.totalorder %s41, %s44
      %p53 = scmp.eq.s32.totalorder %s22, 1
      %p54 = por %p52, %p53
      %p55 = scmp.ne.s32.totalorder %s44, %s45
      %p56 = scmp.eq.s32.totalorder %s22, 0
      %p57 = por %p55, %p56
      %p58 = scmp.ne.s32.totalorder %s44, %s45
      %p59 = scmp.eq.s32.totalorder %s23, 1
      %p60 = por %p58, %p59
      %p62 = scmp.ne.s32.totalorder %s45, %s61
      %p63 = scmp.eq.s32.totalorder %s23, 0
      %p64 = por %p62, %p63
      %s65 = ssub.s32 %s24, %s36
      %s66 = ssub.s32 %s25, %s32
      %s67 = sor.u32 %s65, %s66
      %p68 = scmp.eq.s32.totalorder %s67, 0
      %s70 = sadd.s32 %s69, 1
      %s71 = scalar_select %p68, %s69, %s70
      %p74 = pneg %p68
      %p75 = scmp.eq.s32.totalorder %s17, 1
      %p76 = por %p74, %p75
      %p77 = scmp.ne.s32.totalorder %s69, %s72
      %p78 = scmp.eq.s32.totalorder %s17, 0
      %p79 = por %p77, %p78
      %p80 = scmp.ne.s32.totalorder %s69, %s72
      %p81 = scmp.eq.s32.totalorder %s22, 1
      %p82 = por %p80, %p81
      %p83 = scmp.ne.s32.totalorder %s72, %s73
      %p84 = scmp.eq.s32.totalorder %s22, 0
      %p85 = por %p83, %p84
      %p86 = scmp.ne.s32.totalorder %s72, %s73
      %p87 = scmp.eq.s32.totalorder %s23, 1
      %p88 = por %p86, %p87
      %p90 = scmp.ne.s32.totalorder %s73, %s89
      %p91 = scmp.eq.s32.totalorder %s23, 0
      %p92 = por %p90, %p91
      %s93 = ssub.s32 %s24, %s36
      %p94 = scmp.eq.s32.totalorder %s93, 0
      %s96 = sadd.s32 %s95, 1
      %s97 = scalar_select %p94, %s95, %s96
      %p100 = pneg %p94
      %p101 = scmp.eq.s32.totalorder %s17, 1
      %p102 = por %p100, %p101
      %p103 = scmp.ne.s32.totalorder %s95, %s98
      %p104 = scmp.eq.s32.totalorder %s17, 0
      %p105 = por %p103, %p104
      %p106 = scmp.ne.s32.totalorder %s95, %s98
      %p107 = scmp.eq.s32.totalorder %s22, 1
      %p108 = por %p106, %p107
      %p109 = scmp.ne.s32.totalorder %s98, %s99
      %p110 = scmp.eq.s32.totalorder %s22, 0
      %p111 = por %p109, %p110
      %p112 = scmp.ne.s32.totalorder %s98, %s99
      %p113 = scmp.eq.s32.totalorder %s23, 1
      %p114 = por %p112, %p113
      %p116 = scmp.ne.s32.totalorder %s99, %s115
      %p117 = scmp.eq.s32.totalorder %s23, 0
      %p118 = por %p116, %p117
      %p119 = scmp.le.s32.totalorder 1, %s17
      %p120 = scmp.lt.s32.totalorder %s17, 3
      %p121 = pnand %p119, %p120
      %p122 = pneg %p121
      // Predicated region
      $region9: #{tpu_custom_call.1} parent=5 // pred_check
        _
      $region10: #{tpu_custom_call.1} parent=5 // pred_check_branch
        %124 = sbr.rel (%p121) target = $region12
      $region11: #{tpu_custom_call.1} parent=5 // pred_region
        %s125 = ssub.s32 %s17, 1
      $region12: #{tpu_custom_call.1} parent=5 // pred_fallthru
        _
      %p126 = scmp.lt.s32.totalorder %s17, 2
      // Predicated region
      $region13: #{tpu_custom_call.1} parent=5 // pred_check
        %p127 = pneg %p126
      $region14: #{tpu_custom_call.1} parent=5 // pred_check_branch
        %129 = sbr.rel (%p127) target = $region16
      $region15: #{tpu_custom_call.1} parent=5 // pred_region
        // Predicated region
        $region17: #{tpu_custom_call.1} parent=15 // pred_check
          %p130 = pneg %p51
        $region18: #{tpu_custom_call.1} parent=15 // pred_check_branch
          %132 = sbr.rel (%p130) target = $region20
        $region19: #{tpu_custom_call.1} parent=15 // pred_region
          %s133 = sand.u32 %s41, 1
          %s134 = scalar_lea.sflag [#allocation5], %s133
          %s135 = sand.u32 %s41, 1
          %s136 = smul.addr %s135, 8
          %s137 = scalar_lea.vmem [#allocation4], %s136
          %s139 = ssub.s32 128, 128
          %140 = vsyncadd %s134, %s139
          %s141 = smul.addr %s24, 4
          %s142 = sadd.s32 %s25, %s141
          %s143 = smul.addr %s142, 32
          %s144 = scalar_lea.hbm %s0, %s143
          %s145 = sshll.u32 %s137, 4
          %s146 = int_to_ptr.vmem [resolvable:$true] %s145
          %151 = dma.hbm_to_vmem [thread:$0]  %s144, 128, %s146, %s134, 32, 32, 2
        $region20: #{tpu_custom_call.1} parent=15 // pred_fallthru
          _
        // Predicated region
        $region21: #{tpu_custom_call.1} parent=15 // pred_check
          %p152 = pneg %p79
        $region22: #{tpu_custom_call.1} parent=15 // pred_check_branch
          %154 = sbr.rel (%p152) target = $region24
        $region23: #{tpu_custom_call.1} parent=15 // pred_region
          %s155 = sand.u32 %s69, 1
          %s156 = scalar_lea.sflag [#allocation8], %s155
          %s157 = sand.u32 %s69, 1
          %s158 = smul.addr %s157, 2
          %s159 = scalar_lea.vmem [#allocation7], %s158
          %s161 = ssub.s32 32, 32
          %162 = vsyncadd %s156, %s161
          %s163 = sadd.s32 %s25, %s24
          %s164 = smul.addr %s163, 32
          %s165 = scalar_lea.hbm %s1, %s164
          %s167 = sshll.u32 %s159, 4
          %s168 = int_to_ptr.vmem [resolvable:$true] %s167
          %170 = dma.hbm_to_vmem [thread:$0]  %s165, 32, %s168, %s156
        $region24: #{tpu_custom_call.1} parent=15 // pred_fallthru
          _
      $region16: #{tpu_custom_call.1} parent=5 // pred_fallthru
        _
      %p171 = scmp.le.s32.totalorder 1, %s17
      %p172 = scmp.lt.s32.totalorder %s17, 3
      %p173 = pnand %p171, %p172
      %p174 = pneg %p173
      // Predicated region
      $region25: #{tpu_custom_call.1} parent=5 // pred_check
        _
      $region26: #{tpu_custom_call.1} parent=5 // pred_check_branch
        %176 = sbr.rel (%p173) target = $region28
      $region27: #{tpu_custom_call.1} parent=5 // pred_region
        %s177 = ssub.s32 %s17, 1
        %s178 = sand.u32 %s44, 1
        %s179 = scalar_lea.sflag [#allocation5], %s178
        %s180 = sand.u32 %s44, 1
        %s181 = smul.addr %s180, 8
        %s182 = scalar_lea.vmem [#allocation4], %s181
        // Predicated region
        $region29: #{tpu_custom_call.1} parent=27 // pred_check
          %p183 = pneg %p57
        $region30: #{tpu_custom_call.1} parent=27 // pred_check_branch
          %185 = sbr.rel (%p183) target = $region32
        $region31: #{tpu_custom_call.1} parent=27 // pred_region
          %186 = dma.done %s179, 128
        $region32: #{tpu_custom_call.1} parent=27 // pred_fallthru
          _
        %s187 = sand.u32 %s72, 1
        %s188 = scalar_lea.sflag [#allocation8], %s187
        %s189 = sand.u32 %s72, 1
        %s190 = smul.addr %s189, 2
        %s191 = scalar_lea.vmem [#allocation7], %s190
        // Predicated region
        $region33: #{tpu_custom_call.1} parent=27 // pred_check
          %p192 = pneg %p85
        $region34: #{tpu_custom_call.1} parent=27 // pred_check_branch
          %194 = sbr.rel (%p192) target = $region36
        $region35: #{tpu_custom_call.1} parent=27 // pred_region
          %195 = dma.done %s188, 32
        $region36: #{tpu_custom_call.1} parent=27 // pred_fallthru
          _
        %s196 = sand.u32 %s44, 1
        %s197 = scalar_lea.sflag [#allocation5], %s196
        %s198 = sand.u32 %s44, 1
        %s199 = smul.addr %s198, 8
        %s200 = scalar_lea.vmem [#allocation4], %s199
        %p201 = pneg %p57
        %p202 = pneg %p54
        %s203 = sand.u32 %s72, 1
        %s204 = scalar_lea.sflag [#allocation8], %s203
        %s205 = sand.u32 %s72, 1
        %s206 = smul.addr %s205, 2
        %s207 = scalar_lea.vmem [#allocation7], %s206
        %p208 = pneg %p85
        %p209 = pneg %p82
        %p210 = pneg %p111
        %p211 = pneg %p108
        %s212 = sand.u32 %s98, 1
        %s213 = scalar_lea.sflag [#allocation6], %s212
        %s214 = sand.u32 %s98, 1
        %s215 = smul.addr %s214, 2
        %s216 = scalar_lea.vmem [#allocation9], %s215
        %p217 = scmp.eq.s32.totalorder %s27, 0
        // Predicated region
        $region37: #{tpu_custom_call.1} parent=27 // pred_check
          %p218 = pneg %p217
        $region38: #{tpu_custom_call.1} parent=27 // pred_check_branch
          %220 = sbr.rel (%p218) target = $region40
        $region39: #{tpu_custom_call.1} parent=27 // pred_region
          %221 = vst [vmem:[#allocation2] sm:$0x3] 0.0
          %222 = vst [vmem:[#allocation3] sm:$0x3] 0.0
        $region40: #{tpu_custom_call.1} parent=27 // pred_fallthru
          _
        %v223 = vld [vmem:[%s182] sm:$0x3]
        %v224 = vld [vmem:[%s182 + $0x2] sm:$0x3]
        %v225 = vld [vmem:[%s182 + $0x4] sm:$0x3]
        %v226 = vld [vmem:[%s182 + $0x6] sm:$0x3]
        %v227 = vld [vmem:[%s191] sm:$0x3]
        %vm228 = vcmask 1041408
        %v229 = vsel %vm228, %v223, -inf
        %v230 = vsel %vm228, %v224, -inf
        %v231 = vsel %vm228, %v225, -inf
        %v232 = vsel %vm228, %v226, -inf
        %v233 = vmax.f32 %v229, %v230
        %v234 = vmax.f32 %v231, %v232
        %v235 = vmax.f32 %v233, %v234
        %v236 = vsub.f32 %v223, %v235
        %v237 = vsub.f32 %v224, %v235
        %v238 = vsub.f32 %v225, %v235
        %v239 = vsub.f32 %v226, %v235
        %v240 = vmul.f32 %v236, 1.442695
        %v241 = vpow.pop %v240
        %v242 = vmul.f32 %v237, 1.442695
        %v243 = vpow.pop %v242
        %v244 = vmul.f32 %v238, 1.442695
        %v245 = vpow.pop %v244
        %v246 = vmul.f32 %v239, 1.442695
        %v247 = vpow.pop %v246
        %v248 = vsel %vm228, %v241, 0.0
        %v249 = vsel %vm228, %v243, 0.0
        %v250 = vadd.f32 %v248, %v249
        %v251 = vsel %vm228, %v245, 0.0
        %v252 = vadd.f32 %v250, %v251
        %v253 = vsel %vm228, %v247, 0.0
        %v254 = vadd.f32 %v252, %v253
        %v255 = vlog2.pop %v254
        %v256 = vmul.f32 %v255, 0.6931472
        %v257 = vadd.f32 %v235, %v256
        %vm258 = vcmp.eq.s32.totalorder %v227, 0
        %vm259 = vcmp.eq.s32.totalorder %v227, 1
        %vm260 = vcmp.eq.s32.totalorder %v227, 2
        %vm261 = vcmp.eq.s32.totalorder %v227, 3
        %v262 = vsel %vm258, %v223, 0.0
        %v263 = vsel %vm259, %v224, 0.0
        %v264 = vsel %vm260, %v225, 0.0
        %v265 = vsel %vm261, %v226, 0.0
        %v266 = vsel %vm228, %v262, 0.0
        %v267 = vsel %vm228, %v263, 0.0
        %v268 = vadd.f32 %v266, %v267
        %v269 = vsel %vm228, %v264, 0.0
        %v270 = vadd.f32 %v268, %v269
        %v271 = vsel %vm228, %v265, 0.0
        %v272 = vadd.f32 %v270, %v271
        %v273 = vsel %vm258, %v241, 0.0
        %v274 = vsel %vm259, %v243, 0.0
        %v275 = vsel %vm260, %v245, 0.0
        %v276 = vsel %vm261, %v247, 0.0
        %v277 = vsel %vm228, %v273, 0.0
        %v278 = vsel %vm228, %v274, 0.0
        %v279 = vadd.f32 %v277, %v278
        %v280 = vsel %vm228, %v275, 0.0
        %v281 = vadd.f32 %v279, %v280
        %v282 = vsel %vm228, %v276, 0.0
        %v283 = vadd.f32 %v281, %v282
        %v284 = vrcp.pop %v254
        %v285 = vmul.f32 %v283, %v284
        %v286 = vsub.f32 %v257, %v272
        %v287 = vld [vmem:[#allocation2] sm:$0x3]
        %v288 = vadd.f32 %v285, 0.0
        %v289 = vadd.f32 %v287, %v288
        %290 = vst [vmem:[#allocation2] sm:$0x3] %v289
        %v291 = vld [vmem:[#allocation3] sm:$0x3]
        %v292 = vadd.f32 %v286, 0.0
        %v293 = vadd.f32 %v291, %v292
        %294 = vst [vmem:[#allocation3] sm:$0x3] %v293
        // Predicated region
        $region41: #{tpu_custom_call.1} parent=27 // pred_check
          %p295 = pneg %p217
        $region42: #{tpu_custom_call.1} parent=27 // pred_check_branch
          %297 = sbr.rel (%p295) target = $region44
        $region43: #{tpu_custom_call.1} parent=27 // pred_region
          %v298 = vld [vmem:[#allocation2] sm:$0x3]
          %v299 = vsel %vm228, %v298, 0.0
          %v300 = vrot.slane %v299, 4
          %v301 = vadd.f32 %v299, %v300
          %v302 = vrot.slane %v301, 2
          %v303 = vadd.f32 %v301, %v302
          %v304 = vrot.slane %v303, 1
          %v305 = vadd.f32 %v303, %v304
          %v306 = vld [vmem:[#allocation3] sm:$0x3]
          %v307 = vsel %vm228, %v306, 0.0
          %v308 = vrot.slane %v307, 4
          %v309 = vadd.f32 %v307, %v308
          %v310 = vrot.slane %v309, 2
          %v311 = vadd.f32 %v309, %v310
          %v312 = vrot.slane %v311, 1
          %v313 = vadd.f32 %v311, %v312
          %vm314 = vcmask 1040384
          %v315 = vsel %vm314, %v305, %v313
          %316 = vst [vmem:[%s216] sm:$0x3] %v315
        $region44: #{tpu_custom_call.1} parent=27 // pred_fallthru
          _
        %s317 = sand.u32 %s98, 1
        %s318 = scalar_lea.sflag [#allocation6], %s317
        %s319 = sand.u32 %s98, 1
        %s320 = smul.addr %s319, 2
        %s321 = scalar_lea.vmem [#allocation9], %s320
        // Predicated region
        $region45: #{tpu_custom_call.1} parent=27 // pred_check
          %p322 = pneg %p108
        $region46: #{tpu_custom_call.1} parent=27 // pred_check_branch
          %324 = sbr.rel (%p322) target = $region48
        $region47: #{tpu_custom_call.1} parent=27 // pred_region
          %s326 = ssub.s32 32, 32
          %327 = vsyncadd %s318, %s326
          %s328 = smul.addr %s26, 32
          %s329 = scalar_lea.hbm %s2, %s328
          %s331 = sshll.u32 %s321, 4
          %s332 = int_to_ptr.vmem [resolvable:$true] %s331
          %334 = dma.vmem_to_hbm [thread:$0]  %s332, 32, %s329, %s318
        $region48: #{tpu_custom_call.1} parent=27 // pred_fallthru
          _
      $region28: #{tpu_custom_call.1} parent=5 // pred_fallthru
        _
      %p335 = scmp.le.s32.totalorder 2, %s17
      // Predicated region
      $region49: #{tpu_custom_call.1} parent=5 // pred_check
        %p336 = pneg %p335
      $region50: #{tpu_custom_call.1} parent=5 // pred_check_branch
        %338 = sbr.rel (%p336) target = $region52
      $region51: #{tpu_custom_call.1} parent=5 // pred_region
        %s339 = ssub.s32 %s17, 2
        // Predicated region
        $region53: #{tpu_custom_call.1} parent=51 // pred_check
          %p340 = pneg %p114
        $region54: #{tpu_custom_call.1} parent=51 // pred_check_branch
          %342 = sbr.rel (%p340) target = $region56
        $region55: #{tpu_custom_call.1} parent=51 // pred_region
          %s343 = sand.u32 %s99, 1
          %s344 = scalar_lea.sflag [#allocation6], %s343
          %s345 = sand.u32 %s99, 1
          %s346 = smul.addr %s345, 2
          %s347 = scalar_lea.vmem [#allocation9], %s346
          %348 = dma.done %s344, 32
        $region56: #{tpu_custom_call.1} parent=51 // pred_fallthru
          _
      $region52: #{tpu_custom_call.1} parent=5 // pred_fallthru
        _
    $region6: #{tpu_custom_call.1} parent=1 // loop_footer
      %s21 = sadd.s32 1, %s17
    $region7: #{tpu_custom_call.1} parent=1 // loop_footer_branch
      %16 = sbr.rel target = $region3
    $region8: #{tpu_custom_call.1} parent=1 // loop_exit
      _
    %349 = vsyncpa [#allocation5], 1
    %s350 = scalar_lea.sflag [#allocation5], 1
    %351 = vsyncpa %s350, 1
    %352 = vsyncpa [#allocation8], 1
    %s353 = scalar_lea.sflag [#allocation8], 1
    %354 = vsyncpa %s353, 1
    %355 = vsyncpa [#allocation6], 1
    %s356 = scalar_lea.sflag [#allocation6], 1
    %357 = vsyncpa %s356, 1

</llo_original>
